<compile_context>
chip_gen: v5e
topology: v5e:2x2
jax: 0.10.0
libtpu: 0.0.40
codegen_flags: <defaults>
</compile_context>

<pallas_src>
import functools

import jax
import jax.numpy as jnp
from jax.experimental import pallas as pl
from jax.experimental.pallas import tpu as pltpu


def _round_up(x, m):
    return (x + m - 1) // m * m


def _dice_bce_kernel(pred_ref, tgt_ref, inter_ref, psum_ref, tsum_ref, bce_ref,
                     *, rows_block, total_rows, tiles_per_chunk, needs_mask,
                     binary_bce):
    """grid = (batch, chunk, row_tiles); row_tiles is the reduction axis.

    pred_ref / tgt_ref : (C, rows_block, 128) fully (8,128)-packed VMEM tiles
    *_ref (outputs)    : (C, 128) lane-shaped partial-sum accumulators; their
                         block index ignores the row-tile axis, so the block
                         stays VMEM-resident and acts as an accumulator.
    """
    s = pl.program_id(2)

    @pl.when(s == 0)
    def _init():
        inter_ref[...] = jnp.zeros_like(inter_ref)
        psum_ref[...] = jnp.zeros_like(psum_ref)
        tsum_ref[...] = jnp.zeros_like(tsum_ref)
        bce_ref[...] = jnp.zeros_like(bce_ref)

    p = pred_ref[...].astype(jnp.float32)   # (C, rows_block, 128)
    t = tgt_ref[...].astype(jnp.float32)

    if needs_mask:
        # Zero out rows beyond the true spatial extent (the last tile of the
        # last chunk may be partial or a duplicated tail tile).  Must happen
        # BEFORE the logs so out-of-bounds garbage cannot poison the
        # accumulators.  Zeroed elements contribute exactly 0 to every
        # partial sum (including BCE: p = t = 0 -> bce = 0).
        row0 = (pl.program_id(1) * tiles_per_chunk + s) * rows_block
        row = jax.lax.broadcasted_iota(jnp.int32, p.shape, 1) + row0
        valid = row < total_rows
        p = jnp.where(valid, p, 0.0)
        t = jnp.where(valid, t, 0.0)

    if binary_bce:
        # Exact for t in {0,1}; one transcendental/element instead of two.
        bce = -jnp.maximum(jnp.log(t * p + (1.0 - t) * (1.0 - p)), -100.0)
    else:
        # nn.BCELoss semantics (each log clamped at -100), valid for soft
        # targets.  Rewritten as log(1-p) + t*(log p - log(1-p)).
        log_p = jnp.maximum(jnp.log(p), -100.0)
        log_1mp = jnp.maximum(jnp.log(1.0 - p), -100.0)
        bce = -(log_1mp + t * (log_p - log_1mp))

    # Steady-state loop: reduce only over the sublane-tiled rows axis and
    # accumulate into lane-shaped (C, 128) partials.  The 128-lane reduce,
    # the dice division and the final mean/clamp live in the JAX epilogue.
    # TODO(synk): on v7x, consider offloading these add-reductions to the
    # idle MXU via a ones-matmul if VALU becomes co-critical; neutral on
    # v5e/v6e (HBM-bound), so gate per generation after measuring.
    inter_ref[...] += jnp.sum(p * t, axis=1)
    psum_ref[...] += jnp.sum(p, axis=1)
    tsum_ref[...] += jnp.sum(t, axis=1)
    bce_ref[...] += jnp.sum(bce, axis=1)


def dice_loss(pred, target, *, binary_targets=False,
              target_block_bytes=2 << 20, block_rows=None):
    """Equivalent of DiceLoss().forward(pred, target). Returns a scalar."""
    assert pred.shape == target.shape and pred.ndim == 4
    N, C, H, W = pred.shape
    S = H * W
    itemsize = jnp.dtype(pred.dtype).itemsize

    p = pred.reshape(N, C, S)
    t = target.reshape(N, C, S)

    # Sublane-dense layout: view the spatial dim as (rows, 128) so vregs are
    # fully (8,128)-packed even when C < 8.  Free reshape when S % 128 == 0.
    if S % 128 != 0:
        # TODO(synk): a ragged-lane kernel variant would avoid this one copy;
        # it only fires when H*W is not a multiple of 128.
        s128 = _round_up(S, 128)
        p = jnp.pad(p, ((0, 0), (0, 0), (0, s128 - S)))
        t = jnp.pad(t, ((0, 0), (0, 0), (0, s128 - S)))
    else:
        s128 = S
    rows_total = s128 // 128
    p = p.reshape(N, C, rows_total, 128)
    t = t.reshape(N, C, rows_total, 128)

    # ~2 MiB per input block (x2 inputs x2 pipeline buffers stays well inside
    # every generation's scoped-VMEM budget); a multiple of 8 rows, or the
    # full rows extent when it fits in one block.
    if block_rows is None:
        rows = target_block_bytes // max(1, C * 128 * itemsize)
        rows = max(8, (rows // 8) * 8)
    else:
        rows = block_rows
    rows_block = rows_total if rows >= rows_total else rows
    tiles_total = pl.cdiv(rows_total, rows_block)

    # Give megacore a second parallel axis when N == 1 (v7x has 2 TCs/chip).
    n_chunks = 2 if (N == 1 and tiles_total >= 2) else 1
    tiles_per_chunk = pl.cdiv(tiles_total, n_chunks)
    needs_mask = n_chunks * tiles_per_chunk * rows_block != rows_total

    def in_map(b, c, s):
        # Clamp so duplicated tail tiles re-read the last real tile; their
        # logical rows are >= rows_total so the kernel masks them to zero.
        return (b, 0, jnp.minimum(c * tiles_per_chunk + s, tiles_total - 1), 0)

    in_spec = pl.BlockSpec((None, C, rows_block, 128), in_map)
    out_spec = pl.BlockSpec((None, None, C, 128), lambda b, c, s: (b, c, 0, 0))
    out_struct = jax.ShapeDtypeStruct((N, n_chunks, C, 128), jnp.float32)

    kernel = functools.partial(
        _dice_bce_kernel, rows_block=rows_block, total_rows=rows_total,
        tiles_per_chunk=tiles_per_chunk, needs_mask=needs_mask,
        binary_bce=binary_targets)

    block_in_bytes = C * rows_block * 128 * itemsize
    cost = pl.CostEstimate(
        flops=12 * N * C * rows_total * 128,
        transcendentals=(1 if binary_targets else 2) * N * C * rows_total * 128,
        bytes_accessed=2 * N * C * rows_total * 128 * itemsize
        + 4 * N * n_chunks * C * 128 * 4,
    )

    inter_p, psum_p, tsum_p, bce_p = pl.pallas_call(
        kernel,
        out_shape=(out_struct,) * 4,
        grid_spec=pltpu.PrefetchScalarGridSpec(
            num_scalar_prefetch=0,
            grid=(N, n_chunks, tiles_per_chunk),
            in_specs=[in_spec, in_spec],
            out_specs=[out_spec] * 4,
        ),
        compiler_params=pltpu.CompilerParams(
            dimension_semantics=("parallel", "parallel", "arbitrary"),
            vmem_limit_bytes=int(
                min(64 << 20, max(32 << 20, 4 * block_in_bytes + (8 << 20)))),
        ),
        cost_estimate=cost,
    )(p, t)

    # Tiny JAX epilogue on (N, n_chunks, C, 128) linear partials.
    inter = inter_p.sum(axis=(1, 3))      # (N, C)
    psum = psum_p.sum(axis=(1, 3))
    tsum = tsum_p.sum(axis=(1, 3))
    bce_sum = bce_p.sum()

    smooth = 1e-6
    dice = jnp.sum(2.0 * inter / (psum + tsum + smooth), axis=1) / C   # (N,)
    dice_term = jnp.clip(jnp.mean(1.0 - dice), 0.0, 1.0)
    bce_mean = bce_sum / float(N * C * S)
    return dice_term + 4.0 * bce_mean


def _dice_loss_ref(pred, target):
    """Pure-JAX reference mirroring the PyTorch forward."""
    smooth = 1e-6
    inter = jnp.sum(pred * target, axis=(2, 3))
    psum = jnp.sum(pred, axis=(2, 3))
    tsum = jnp.sum(target, axis=(2, 3))
    dice = jnp.sum(2.0 * inter / (psum + tsum + smooth), axis=1) / pred.shape[1]
    log_p = jnp.maximum(jnp.log(pred), -100.0)
    log_1mp = jnp.maximum(jnp.log(1.0 - pred), -100.0)
    bce = jnp.mean(-(target * log_p + (1.0 - target) * log_1mp))
    return jnp.clip(jnp.mean(1.0 - dice), 0.0, 1.0) + 4.0 * bce


if __name__ == "__main__":
    def _check(shape, key, **kw):
        k1, k2 = jax.random.split(key)
        # BCELoss requires pred in (0, 1); targets in [0, 1].
        pred = jax.nn.sigmoid(jax.random.normal(k1, shape, jnp.float32))
        target = (jax.random.uniform(k2, shape) > 0.5).astype(jnp.float32)
        out = dice_loss(pred, target, **kw)
        jax.block_until_ready(out)
        ref = _dice_loss_ref(pred, target)
        assert jnp.allclose(out, ref, atol=1e-4, rtol=1e-4), (shape, out, ref)
        return out

    keys = jax.random.split(jax.random.PRNGKey(0), 4)
    _check((2, 4, 16, 16), keys[0])                        # base case
    _check((1, 3, 48, 32), keys[1], block_rows=8)          # multi-tile + chunk split + row mask
    _check((2, 2, 10, 10), keys[2])                        # H*W % 128 != 0 fallback path
    _check((1, 4, 16, 16), keys[3], binary_targets=True)   # single-log BCE path
    print("KERNEL_OK")
</pallas_src>

<mosaic_0001>
module attributes {stable_mosaic.version = 11 : i64} {
  func.func @_dice_bce_kernel(%arg0: i32, %arg1: i32, %arg2: i32, %arg3: memref<1x4x2x128xf32, #tpu.memory_space<vmem>>, %arg4: memref<1x4x2x128xf32, #tpu.memory_space<vmem>>, %arg5: memref<1x1x4x128xf32, #tpu.memory_space<vmem>>, %arg6: memref<1x1x4x128xf32, #tpu.memory_space<vmem>>, %arg7: memref<1x1x4x128xf32, #tpu.memory_space<vmem>>, %arg8: memref<1x1x4x128xf32, #tpu.memory_space<vmem>>) attributes {dimension_semantics = [#tpu.dimension_semantics<parallel>, #tpu.dimension_semantics<parallel>, #tpu.dimension_semantics<arbitrary>], iteration_bounds = array<i64: 2, 1, 1>, scalar_prefetch = 0 : i64, scratch_operands = 0 : i64, tpu.core_type = #tpu.core_type<tc>, window_params = [{transform_indices = @transform_0, window_bounds = array<i64: 1, 4, 2, 128>}, {transform_indices = @transform_1, window_bounds = array<i64: 1, 4, 2, 128>}, {transform_indices = @transform_2, window_bounds = array<i64: 1, 1, 4, 128>}, {transform_indices = @transform_3, window_bounds = array<i64: 1, 1, 4, 128>}, {transform_indices = @transform_4, window_bounds = array<i64: 1, 1, 4, 128>}, {transform_indices = @transform_5, window_bounds = array<i64: 1, 1, 4, 128>}]} {
    %c0_i32 = arith.constant 0 : i32
    %0 = arith.cmpi eq, %arg2, %c0_i32 : i32
    %1 = arith.extui %0 : i1 to i32
    %c0_i32_0 = arith.constant 0 : i32
    %2 = arith.cmpi ne, %1, %c0_i32_0 : i32
    scf.if %2 {
      %cst_47 = arith.constant 0.000000e+00 : f32
      %49 = vector.broadcast %cst_47 : f32 to vector<4x128xf32>
      %c0_48 = arith.constant 0 : index
      %c0_49 = arith.constant 0 : index
      %c0_50 = arith.constant 0 : index
      %c0_51 = arith.constant 0 : index
      %50 = vector.load %arg5[%c0_48, %c0_49, %c0_50, %c0_51] : memref<1x1x4x128xf32, #tpu.memory_space<vmem>>, vector<1x1x4x128xf32>
      %51 = vector.shape_cast %50 : vector<1x1x4x128xf32> to vector<4x128xf32>
      %52 = vector.shape_cast %49 : vector<4x128xf32> to vector<1x1x4x128xf32>
      tpu.vector_store %arg5[%c0_48, %c0_49, %c0_50, %c0_51], %52 {strides = array<i32>} : memref<1x1x4x128xf32, #tpu.memory_space<vmem>>, vector<1x1x4x128xf32>,
      %cst_52 = arith.constant 0.000000e+00 : f32
      %53 = vector.broadcast %cst_52 : f32 to vector<4x128xf32>
      %c0_53 = arith.constant 0 : index
      %c0_54 = arith.constant 0 : index
      %c0_55 = arith.constant 0 : index
      %c0_56 = arith.constant 0 : index
      %54 = vector.load %arg6[%c0_53, %c0_54, %c0_55, %c0_56] : memref<1x1x4x128xf32, #tpu.memory_space<vmem>>, vector<1x1x4x128xf32>
      %55 = vector.shape_cast %54 : vector<1x1x4x128xf32> to vector<4x128xf32>
      %56 = vector.shape_cast %53 : vector<4x128xf32> to vector<1x1x4x128xf32>
      tpu.vector_store %arg6[%c0_53, %c0_54, %c0_55, %c0_56], %56 {strides = array<i32>} : memref<1x1x4x128xf32, #tpu.memory_space<vmem>>, vector<1x1x4x128xf32>,
      %cst_57 = arith.constant 0.000000e+00 : f32
      %57 = vector.broadcast %cst_57 : f32 to vector<4x128xf32>
      %c0_58 = arith.constant 0 : index
      %c0_59 = arith.constant 0 : index
      %c0_60 = arith.constant 0 : index
      %c0_61 = arith.constant 0 : index
      %58 = vector.load %arg7[%c0_58, %c0_59, %c0_60, %c0_61] : memref<1x1x4x128xf32, #tpu.memory_space<vmem>>, vector<1x1x4x128xf32>
      %59 = vector.shape_cast %58 : vector<1x1x4x128xf32> to vector<4x128xf32>
      %60 = vector.shape_cast %57 : vector<4x128xf32> to vector<1x1x4x128xf32>
      tpu.vector_store %arg7[%c0_58, %c0_59, %c0_60, %c0_61], %60 {strides = array<i32>} : memref<1x1x4x128xf32, #tpu.memory_space<vmem>>, vector<1x1x4x128xf32>,
      %cst_62 = arith.constant 0.000000e+00 : f32
      %61 = vector.broadcast %cst_62 : f32 to vector<4x128xf32>
      %c0_63 = arith.constant 0 : index
      %c0_64 = arith.constant 0 : index
      %c0_65 = arith.constant 0 : index
      %c0_66 = arith.constant 0 : index
      %62 = vector.load %arg8[%c0_63, %c0_64, %c0_65, %c0_66] : memref<1x1x4x128xf32, #tpu.memory_space<vmem>>, vector<1x1x4x128xf32>
      %63 = vector.shape_cast %62 : vector<1x1x4x128xf32> to vector<4x128xf32>
      %64 = vector.shape_cast %61 : vector<4x128xf32> to vector<1x1x4x128xf32>
      tpu.vector_store %arg8[%c0_63, %c0_64, %c0_65, %c0_66], %64 {strides = array<i32>} : memref<1x1x4x128xf32, #tpu.memory_space<vmem>>, vector<1x1x4x128xf32>,
    } else {
    }
    %c0 = arith.constant 0 : index
    %c0_1 = arith.constant 0 : index
    %c0_2 = arith.constant 0 : index
    %c0_3 = arith.constant 0 : index
    %3 = vector.load %arg3[%c0, %c0_1, %c0_2, %c0_3] : memref<1x4x2x128xf32, #tpu.memory_space<vmem>>, vector<1x4x2x128xf32>
    %4 = vector.shape_cast %3 : vector<1x4x2x128xf32> to vector<4x2x128xf32>
    %c0_4 = arith.constant 0 : index
    %c0_5 = arith.constant 0 : index
    %c0_6 = arith.constant 0 : index
    %c0_7 = arith.constant 0 : index
    %5 = vector.load %arg4[%c0_4, %c0_5, %c0_6, %c0_7] : memref<1x4x2x128xf32, #tpu.memory_space<vmem>>, vector<1x4x2x128xf32>
    %6 = vector.shape_cast %5 : vector<1x4x2x128xf32> to vector<4x2x128xf32>
    %7 = math.log %4 : vector<4x2x128xf32>
    %cst = arith.constant -1.000000e+02 : f32
    %8 = vector.broadcast %cst : f32 to vector<4x2x128xf32>
    %9 = arith.maximumf %7, %8 : vector<4x2x128xf32>
    %cst_8 = arith.constant 1.000000e+00 : f32
    %10 = vector.broadcast %cst_8 : f32 to vector<4x2x128xf32>
    %11 = arith.subf %10, %4 : vector<4x2x128xf32>
    %12 = math.log %11 : vector<4x2x128xf32>
    %cst_9 = arith.constant -1.000000e+02 : f32
    %13 = vector.broadcast %cst_9 : f32 to vector<4x2x128xf32>
    %14 = arith.maximumf %12, %13 : vector<4x2x128xf32>
    %15 = arith.subf %9, %14 : vector<4x2x128xf32>
    %16 = arith.mulf %6, %15 : vector<4x2x128xf32>
    %17 = arith.addf %14, %16 : vector<4x2x128xf32>
    %cst_10 = arith.constant 0.000000e+00 : f32
    %18 = vector.broadcast %cst_10 : f32 to vector<4x2x128xf32>
    %19 = arith.subf %18, %17 : vector<4x2x128xf32>
    %c0_11 = arith.constant 0 : index
    %c0_12 = arith.constant 0 : index
    %c0_13 = arith.constant 0 : index
    %c0_14 = arith.constant 0 : index
    %20 = vector.load %arg5[%c0_11, %c0_12, %c0_13, %c0_14] : memref<1x1x4x128xf32, #tpu.memory_space<vmem>>, vector<1x1x4x128xf32>
    %21 = vector.shape_cast %20 : vector<1x1x4x128xf32> to vector<4x128xf32>
    %22 = arith.mulf %4, %6 : vector<4x2x128xf32>
    %cst_15 = arith.constant dense<0.000000e+00> : vector<4x128xf32>
    %23 = vector.multi_reduction <add>, %22, %cst_15 [1] : vector<4x2x128xf32> to vector<4x128xf32>
    %24 = arith.addf %21, %23 : vector<4x128xf32>
    %c0_16 = arith.constant 0 : index
    %c0_17 = arith.constant 0 : index
    %c0_18 = arith.constant 0 : index
    %c0_19 = arith.constant 0 : index
    %25 = vector.load %arg5[%c0_16, %c0_17, %c0_18, %c0_19] : memref<1x1x4x128xf32, #tpu.memory_space<vmem>>, vector<1x1x4x128xf32>
    %26 = vector.shape_cast %25 : vector<1x1x4x128xf32> to vector<4x128xf32>
    %27 = vector.shape_cast %24 : vector<4x128xf32> to vector<1x1x4x128xf32>
    tpu.vector_store %arg5[%c0_16, %c0_17, %c0_18, %c0_19], %27 {strides = array<i32>} : memref<1x1x4x128xf32, #tpu.memory_space<vmem>>, vector<1x1x4x128xf32>,
    %c0_20 = arith.constant 0 : index
    %c0_21 = arith.constant 0 : index
    %c0_22 = arith.constant 0 : index
    %c0_23 = arith.constant 0 : index
    %28 = vector.load %arg6[%c0_20, %c0_21, %c0_22, %c0_23] : memref<1x1x4x128xf32, #tpu.memory_space<vmem>>, vector<1x1x4x128xf32>
    %29 = vector.shape_cast %28 : vector<1x1x4x128xf32> to vector<4x128xf32>
    %cst_24 = arith.constant dense<0.000000e+00> : vector<4x128xf32>
    %30 = vector.multi_reduction <add>, %4, %cst_24 [1] : vector<4x2x128xf32> to vector<4x128xf32>
    %31 = arith.addf %29, %30 : vector<4x128xf32>
    %c0_25 = arith.constant 0 : index
    %c0_26 = arith.constant 0 : index
    %c0_27 = arith.constant 0 : index
    %c0_28 = arith.constant 0 : index
    %32 = vector.load %arg6[%c0_25, %c0_26, %c0_27, %c0_28] : memref<1x1x4x128xf32, #tpu.memory_space<vmem>>, vector<1x1x4x128xf32>
    %33 = vector.shape_cast %32 : vector<1x1x4x128xf32> to vector<4x128xf32>
    %34 = vector.shape_cast %31 : vector<4x128xf32> to vector<1x1x4x128xf32>
    tpu.vector_store %arg6[%c0_25, %c0_26, %c0_27, %c0_28], %34 {strides = array<i32>} : memref<1x1x4x128xf32, #tpu.memory_space<vmem>>, vector<1x1x4x128xf32>,
    %c0_29 = arith.constant 0 : index
    %c0_30 = arith.constant 0 : index
    %c0_31 = arith.constant 0 : index
    %c0_32 = arith.constant 0 : index
    %35 = vector.load %arg7[%c0_29, %c0_30, %c0_31, %c0_32] : memref<1x1x4x128xf32, #tpu.memory_space<vmem>>, vector<1x1x4x128xf32>
    %36 = vector.shape_cast %35 : vector<1x1x4x128xf32> to vector<4x128xf32>
    %cst_33 = arith.constant dense<0.000000e+00> : vector<4x128xf32>
    %37 = vector.multi_reduction <add>, %6, %cst_33 [1] : vector<4x2x128xf32> to vector<4x128xf32>
    %38 = arith.addf %36, %37 : vector<4x128xf32>
    %c0_34 = arith.constant 0 : index
    %c0_35 = arith.constant 0 : index
    %c0_36 = arith.constant 0 : index
    %c0_37 = arith.constant 0 : index
    %39 = vector.load %arg7[%c0_34, %c0_35, %c0_36, %c0_37] : memref<1x1x4x128xf32, #tpu.memory_space<vmem>>, vector<1x1x4x128xf32>
    %40 = vector.shape_cast %39 : vector<1x1x4x128xf32> to vector<4x128xf32>
    %41 = vector.shape_cast %38 : vector<4x128xf32> to vector<1x1x4x128xf32>
    tpu.vector_store %arg7[%c0_34, %c0_35, %c0_36, %c0_37], %41 {strides = array<i32>} : memref<1x1x4x128xf32, #tpu.memory_space<vmem>>, vector<1x1x4x128xf32>,
    %c0_38 = arith.constant 0 : index
    %c0_39 = arith.constant 0 : index
    %c0_40 = arith.constant 0 : index
    %c0_41 = arith.constant 0 : index
    %42 = vector.load %arg8[%c0_38, %c0_39, %c0_40, %c0_41] : memref<1x1x4x128xf32, #tpu.memory_space<vmem>>, vector<1x1x4x128xf32>
    %43 = vector.shape_cast %42 : vector<1x1x4x128xf32> to vector<4x128xf32>
    %cst_42 = arith.constant dense<0.000000e+00> : vector<4x128xf32>
    %44 = vector.multi_reduction <add>, %19, %cst_42 [1] : vector<4x2x128xf32> to vector<4x128xf32>
    %45 = arith.addf %43, %44 : vector<4x128xf32>
    %c0_43 = arith.constant 0 : index
    %c0_44 = arith.constant 0 : index
    %c0_45 = arith.constant 0 : index
    %c0_46 = arith.constant 0 : index
    %46 = vector.load %arg8[%c0_43, %c0_44, %c0_45, %c0_46] : memref<1x1x4x128xf32, #tpu.memory_space<vmem>>, vector<1x1x4x128xf32>
    %47 = vector.shape_cast %46 : vector<1x1x4x128xf32> to vector<4x128xf32>
    %48 = vector.shape_cast %45 : vector<4x128xf32> to vector<1x1x4x128xf32>
    tpu.vector_store %arg8[%c0_43, %c0_44, %c0_45, %c0_46], %48 {strides = array<i32>} : memref<1x1x4x128xf32, #tpu.memory_space<vmem>>, vector<1x1x4x128xf32>,
    return
  }
  func.func @transform_0(%arg0: i32, %arg1: i32, %arg2: i32) -> (i32, i32, i32, i32) {
    %c1_i32 = arith.constant 1 : i32
    %0 = arith.muli %arg1, %c1_i32 : i32
    %1 = arith.addi %0, %arg2 : i32
    %c0_i32 = arith.constant 0 : i32
    %2 = arith.minsi %1, %c0_i32 : i32
    %c0_i32_0 = arith.constant 0 : i32
    %c0_i32_1 = arith.constant 0 : i32
    %c0_i32_2 = arith.constant 0 : i32
    return %arg0, %c0_i32_0, %2, %c0_i32_1 : i32, i32, i32, i32
  }
  func.func @transform_1(%arg0: i32, %arg1: i32, %arg2: i32) -> (i32, i32, i32, i32) {
    %c1_i32 = arith.constant 1 : i32
    %0 = arith.muli %arg1, %c1_i32 : i32
    %1 = arith.addi %0, %arg2 : i32
    %c0_i32 = arith.constant 0 : i32
    %2 = arith.minsi %1, %c0_i32 : i32
    %c0_i32_0 = arith.constant 0 : i32
    %c0_i32_1 = arith.constant 0 : i32
    %c0_i32_2 = arith.constant 0 : i32
    return %arg0, %c0_i32_0, %2, %c0_i32_1 : i32, i32, i32, i32
  }
  func.func @transform_2(%arg0: i32, %arg1: i32, %arg2: i32) -> (i32, i32, i32, i32) {
    %c0_i32 = arith.constant 0 : i32
    %c0_i32_0 = arith.constant 0 : i32
    %c0_i32_1 = arith.constant 0 : i32
    return %arg0, %arg1, %c0_i32, %c0_i32_0 : i32, i32, i32, i32
  }
  func.func @transform_3(%arg0: i32, %arg1: i32, %arg2: i32) -> (i32, i32, i32, i32) {
    %c0_i32 = arith.constant 0 : i32
    %c0_i32_0 = arith.constant 0 : i32
    %c0_i32_1 = arith.constant 0 : i32
    return %arg0, %arg1, %c0_i32, %c0_i32_0 : i32, i32, i32, i32
  }
  func.func @transform_4(%arg0: i32, %arg1: i32, %arg2: i32) -> (i32, i32, i32, i32) {
    %c0_i32 = arith.constant 0 : i32
    %c0_i32_0 = arith.constant 0 : i32
    %c0_i32_1 = arith.constant 0 : i32
    return %arg0, %arg1, %c0_i32, %c0_i32_0 : i32, i32, i32, i32
  }
  func.func @transform_5(%arg0: i32, %arg1: i32, %arg2: i32) -> (i32, i32, i32, i32) {
    %c0_i32 = arith.constant 0 : i32
    %c0_i32_0 = arith.constant 0 : i32
    %c0_i32_1 = arith.constant 0 : i32
    return %arg0, %arg1, %c0_i32, %c0_i32_0 : i32, i32, i32, i32
  }
}

</mosaic_0001>

<llo_original>
// kernel: tpu_custom_call.1
$region0: #{tpu_custom_call.1}
  #allocation0 [shape = 'u32[]', space=smem, size = 0x4, offset = 0x4, fixed_abs, tag = 'smem constant byte address 0x4 - core index']
  #allocation1 [shape = 'u32[72,128]{1,0:T(1,128)}', space=vmem, size = 0x9000, scoped, tag = 'internal scratch']
  %s0 = inlined_call_operand.hbm [shape: f32[2,4,2,128], index: 0, kind: input, shape index: {}]
  %s1 = inlined_call_operand.hbm [shape: f32[2,4,2,128], index: 1, kind: input, shape index: {}]
  %s2 = inlined_call_operand.hbm [shape: f32[2,1,4,128], index: 2, kind: output, shape index: {0}]
  %s3 = inlined_call_operand.hbm [shape: f32[2,1,4,128], index: 3, kind: output, shape index: {1}]
  %s4 = inlined_call_operand.hbm [shape: f32[2,1,4,128], index: 4, kind: output, shape index: {2}]
  %s5 = inlined_call_operand.hbm [shape: f32[2,1,4,128], index: 5, kind: output, shape index: {3}]
  %6 = xla_tuple %s2, %s3, %s4, %s5
  %s7 = sld [smem:[#allocation0]]
  $region77: #{tpu_custom_call.1} parent=0
    _
  %s9 = ssub.s32 1, %s7
  %s10 = scalar_select 0, %s9, %s7
  $region1: #{tpu_custom_call.1} parent=0
    #allocation2 [shape = 'u8[8192]{0}', space=vmem, size = 0x2000, scoped, tag = 'input window, operand 0']
    #allocation3 [shape = 's32[2]{0}', space=sflag, size = 0x8, scoped, tag = 'scoped memory for tpu_custom_call.1']
    #allocation4 [shape = 's32[2]{0}', space=sflag, size = 0x8, scoped, tag = 'scoped memory for tpu_custom_call.1']
    #allocation5 [shape = 'u8[8192]{0}', space=vmem, size = 0x2000, scoped, tag = 'input window, operand 1']
    #allocation6 [shape = 's32[2]{0}', space=sflag, size = 0x8, scoped, tag = 'scoped memory for tpu_custom_call.1']
    #allocation7 [shape = 'u8[4096]{0}', space=vmem, size = 0x1000, scoped, tag = 'output window, operand 0']
    #allocation8 [shape = 'u8[4096]{0}', space=vmem, size = 0x1000, scoped, tag = 'output window, operand 1']
    #allocation9 [shape = 's32[2]{0}', space=sflag, size = 0x8, scoped, tag = 'scoped memory for tpu_custom_call.1']
    #allocation10 [shape = 'u8[4096]{0}', space=vmem, size = 0x1000, scoped, tag = 'output window, operand 2']
    #allocation11 [shape = 'u8[4096]{0}', space=vmem, size = 0x1000, scoped, tag = 'output window, operand 3']
    #allocation12 [shape = 's32[2]{0}', space=sflag, size = 0x8, scoped, tag = 'scoped memory for tpu_custom_call.1']
    %11 = vsyncpa [#allocation3], 0
    %s12 = scalar_lea.sflag [#allocation3], 1
    %13 = vsyncpa %s12, 0
    %14 = vsyncpa [#allocation6], 0
    %s15 = scalar_lea.sflag [#allocation6], 1
    %16 = vsyncpa %s15, 0
    %17 = vsyncpa [#allocation4], 0
    %s18 = scalar_lea.sflag [#allocation4], 1
    %19 = vsyncpa %s18, 0
    %20 = vsyncpa [#allocation9], 0
    %s21 = scalar_lea.sflag [#allocation9], 1
    %22 = vsyncpa %s21, 0
    %23 = vsyncpa [#allocation12], 0
    %s24 = scalar_lea.sflag [#allocation12], 1
    %25 = vsyncpa %s24, 0
    loop: start=0, step=1, limit=4
    $region2: #{tpu_custom_call.1} parent=1 // loop_pre_header
      _
    $region3: #{tpu_custom_call.1} parent=1 // loop_header
      %s27 = sphi 0, %s31
      %p28 = scmp.ge.s32.totalorder %s27, 4
      %s34 = sphi 0, %s53
      %s35 = sphi 0, %s49
      %s36 = sphi 0, %s45
      %s37 = sphi 0, %s34
      %s38 = sphi 0, %s35
      %s39 = sphi 0, %s36
      %s40 = sphi 0, %s37
      %s41 = sphi 0, %s38
      %s42 = sphi 0, %s39
      %s64 = sphi 0, %s66
      %s67 = sphi 0, %s64
      %s68 = sphi 0, %s67
      %s84 = sphi 0, %s68
      %s98 = sphi 0, %s100
      %s101 = sphi 0, %s98
      %s102 = sphi 0, %s101
      %s118 = sphi 0, %s102
      %s126 = sphi 0, %s128
      %s129 = sphi 0, %s126
      %s130 = sphi 0, %s129
      %s146 = sphi 0, %s130
      %s154 = sphi 0, %s156
      %s157 = sphi 0, %s154
      %s158 = sphi 0, %s157
      %s174 = sphi 0, %s158
      %s182 = sphi 0, %s184
      %s185 = sphi 0, %s182
      %s186 = sphi 0, %s185
      %s202 = sphi 0, %s186
      %s210 = sphi 0, %s212
      %s213 = sphi 0, %s210
      %s214 = sphi 0, %s213
      %s230 = sphi 0, %s214
    $region4: #{tpu_custom_call.1} parent=1 // loop_header_branch
      %30 = sbr.rel (%p28) target = $region8
    $region5: #{tpu_custom_call.1} parent=1 // loop_body
      %s32 = ssub.s32 %s27, 1
      %s33 = ssub.s32 %s27, 2
      %s43 = sadd.s32 1, %s36
      %p44 = scmp.ge.s32.totalorder %s43, 1
      %s45 = scalar_select %p44, 0, %s43
      %s46 = sadd.s32 1, %s35
      %s47 = scalar_select %p44, %s46, %s35
      %p48 = scmp.ge.s32.totalorder %s47, 1
      %s49 = scalar_select %p48, 0, %s47
      %s50 = sadd.s32 1, %s34
      %s51 = scalar_select %p48, %s50, %s34
      %p52 = scmp.ge.s32.totalorder %s51, 2
      %s53 = scalar_select %p52, 0, %s51
      %s54 = sadd.s32 %s35, %s36
      %p55 = scmp.lt.s32.totalorder %s54, 0
      %s56 = scalar_select %p55, %s54, 0
      %s57 = sadd.s32 %s49, %s45
      %p58 = scmp.lt.s32.totalorder %s57, 0
      %s59 = scalar_select %p58, %s57, 0
      %s60 = ssub.s32 %s34, %s53
      %s61 = ssub.s32 %s56, %s59
      %s62 = sor.u32 %s60, %s61
      %p63 = scmp.eq.s32.totalorder %s62, 0
      %s65 = sadd.s32 %s64, 1
      %s66 = scalar_select %p63, %s64, %s65
      %p69 = pneg %p63
      %p70 = scmp.eq.s32.totalorder %s27, 1
      %p71 = por %p69, %p70
      %p72 = scmp.ne.s32.totalorder %s64, %s67
      %p73 = scmp.eq.s32.totalorder %s27, 0
      %p74 = por %p72, %p73
      %p75 = scmp.ne.s32.totalorder %s64, %s67
      %p76 = scmp.eq.s32.totalorder %s32, 1
      %p77 = por %p75, %p76
      %p78 = scmp.ne.s32.totalorder %s67, %s68
      %p79 = scmp.eq.s32.totalorder %s32, 0
      %p80 = por %p78, %p79
      %p81 = scmp.ne.s32.totalorder %s67, %s68
      %p82 = scmp.eq.s32.totalorder %s33, 1
      %p83 = por %p81, %p82
      %p85 = scmp.ne.s32.totalorder %s68, %s84
      %p86 = scmp.eq.s32.totalorder %s33, 0
      %p87 = por %p85, %p86
      %s88 = sadd.s32 %s35, %s36
      %p89 = scmp.lt.s32.totalorder %s88, 0
      %s90 = scalar_select %p89, %s88, 0
      %s91 = sadd.s32 %s49, %s45
      %p92 = scmp.lt.s32.totalorder %s91, 0
      %s93 = scalar_select %p92, %s91, 0
      %s94 = ssub.s32 %s34, %s53
      %s95 = ssub.s32 %s90, %s93
      %s96 = sor.u32 %s94, %s95
      %p97 = scmp.eq.s32.totalorder %s96, 0
      %s99 = sadd.s32 %s98, 1
      %s100 = scalar_select %p97, %s98, %s99
      %p103 = pneg %p97
      %p104 = scmp.eq.s32.totalorder %s27, 1
      %p105 = por %p103, %p104
      %p106 = scmp.ne.s32.totalorder %s98, %s101
      %p107 = scmp.eq.s32.totalorder %s27, 0
      %p108 = por %p106, %p107
      %p109 = scmp.ne.s32.totalorder %s98, %s101
      %p110 = scmp.eq.s32.totalorder %s32, 1
      %p111 = por %p109, %p110
      %p112 = scmp.ne.s32.totalorder %s101, %s102
      %p113 = scmp.eq.s32.totalorder %s32, 0
      %p114 = por %p112, %p113
      %p115 = scmp.ne.s32.totalorder %s101, %s102
      %p116 = scmp.eq.s32.totalorder %s33, 1
      %p117 = por %p115, %p116
      %p119 = scmp.ne.s32.totalorder %s102, %s118
      %p120 = scmp.eq.s32.totalorder %s33, 0
      %p121 = por %p119, %p120
      %s122 = ssub.s32 %s34, %s53
      %s123 = ssub.s32 %s35, %s49
      %s124 = sor.u32 %s122, %s123
      %p125 = scmp.eq.s32.totalorder %s124, 0
      %s127 = sadd.s32 %s126, 1
      %s128 = scalar_select %p125, %s126, %s127
      %p131 = pneg %p125
      %p132 = scmp.eq.s32.totalorder %s27, 1
      %p133 = por %p131, %p132
      %p134 = scmp.ne.s32.totalorder %s126, %s129
      %p135 = scmp.eq.s32.totalorder %s27, 0
      %p136 = por %p134, %p135
      %p137 = scmp.ne.s32.totalorder %s126, %s129
      %p138 = scmp.eq.s32.totalorder %s32, 1
      %p139 = por %p137, %p138
      %p140 = scmp.ne.s32.totalorder %s129, %s130
      %p141 = scmp.eq.s32.totalorder %s32, 0
      %p142 = por %p140, %p141
      %p143 = scmp.ne.s32.totalorder %s129, %s130
      %p144 = scmp.eq.s32.totalorder %s33, 1
      %p145 = por %p143, %p144
      %p147 = scmp.ne.s32.totalorder %s130, %s146
      %p148 = scmp.eq.s32.totalorder %s33, 0
      %p149 = por %p147, %p148
      %s150 = ssub.s32 %s34, %s53
      %s151 = ssub.s32 %s35, %s49
      %s152 = sor.u32 %s150, %s151
      %p153 = scmp.eq.s32.totalorder %s152, 0
      %s155 = sadd.s32 %s154, 1
      %s156 = scalar_select %p153, %s154, %s155
      %p159 = pneg %p153
      %p160 = scmp.eq.s32.totalorder %s27, 1
      %p161 = por %p159, %p160
      %p162 = scmp.ne.s32.totalorder %s154, %s157
      %p163 = scmp.eq.s32.totalorder %s27, 0
      %p164 = por %p162, %p163
      %p165 = scmp.ne.s32.totalorder %s154, %s157
      %p166 = scmp.eq.s32.totalorder %s32, 1
      %p167 = por %p165, %p166
      %p168 = scmp.ne.s32.totalorder %s157, %s158
      %p169 = scmp.eq.s32.totalorder %s32, 0
      %p170 = por %p168, %p169
      %p171 = scmp.ne.s32.totalorder %s157, %s158
      %p172 = scmp.eq.s32.totalorder %s33, 1
      %p173 = por %p171, %p172
      %p175 = scmp.ne.s32.totalorder %s158, %s174
      %p176 = scmp.eq.s32.totalorder %s33, 0
      %p177 = por %p175, %p176
      %s178 = ssub.s32 %s34, %s53
      %s179 = ssub.s32 %s35, %s49
      %s180 = sor.u32 %s178, %s179
      %p181 = scmp.eq.s32.totalorder %s180, 0
      %s183 = sadd.s32 %s182, 1
      %s184 = scalar_select %p181, %s182, %s183
      %p187 = pneg %p181
      %p188 = scmp.eq.s32.totalorder %s27, 1
      %p189 = por %p187, %p188
      %p190 = scmp.ne.s32.totalorder %s182, %s185
      %p191 = scmp.eq.s32.totalorder %s27, 0
      %p192 = por %p190, %p191
      %p193 = scmp.ne.s32.totalorder %s182, %s185
      %p194 = scmp.eq.s32.totalorder %s32, 1
      %p195 = por %p193, %p194
      %p196 = scmp.ne.s32.totalorder %s185, %s186
      %p197 = scmp.eq.s32.totalorder %s32, 0
      %p198 = por %p196, %p197
      %p199 = scmp.ne.s32.totalorder %s185, %s186
      %p200 = scmp.eq.s32.totalorder %s33, 1
      %p201 = por %p199, %p200
      %p203 = scmp.ne.s32.totalorder %s186, %s202
      %p204 = scmp.eq.s32.totalorder %s33, 0
      %p205 = por %p203, %p204
      %s206 = ssub.s32 %s34, %s53
      %s207 = ssub.s32 %s35, %s49
      %s208 = sor.u32 %s206, %s207
      %p209 = scmp.eq.s32.totalorder %s208, 0
      %s211 = sadd.s32 %s210, 1
      %s212 = scalar_select %p209, %s210, %s211
      %p215 = pneg %p209
      %p216 = scmp.eq.s32.totalorder %s27, 1
      %p217 = por %p215, %p216
      %p218 = scmp.ne.s32.totalorder %s210, %s213
      %p219 = scmp.eq.s32.totalorder %s27, 0
      %p220 = por %p218, %p219
      %p221 = scmp.ne.s32.totalorder %s210, %s213
      %p222 = scmp.eq.s32.totalorder %s32, 1
      %p223 = por %p221, %p222
      %p224 = scmp.ne.s32.totalorder %s213, %s214
      %p225 = scmp.eq.s32.totalorder %s32, 0
      %p226 = por %p224, %p225
      %p227 = scmp.ne.s32.totalorder %s213, %s214
      %p228 = scmp.eq.s32.totalorder %s33, 1
      %p229 = por %p227, %p228
      %p231 = scmp.ne.s32.totalorder %s214, %s230
      %p232 = scmp.eq.s32.totalorder %s33, 0
      %p233 = por %p231, %p232
      %p234 = scmp.le.s32.totalorder 1, %s27
      %p235 = scmp.lt.s32.totalorder %s27, 3
      %p236 = pnand %p234, %p235
      %p237 = pneg %p236
      // Predicated region
      $region9: #{tpu_custom_call.1} parent=5 // pred_check
        _
      $region10: #{tpu_custom_call.1} parent=5 // pred_check_branch
        %239 = sbr.rel (%p236) target = $region12
      $region11: #{tpu_custom_call.1} parent=5 // pred_region
        %s240 = ssub.s32 %s27, 1
      $region12: #{tpu_custom_call.1} parent=5 // pred_fallthru
        _
      %p241 = scmp.lt.s32.totalorder %s27, 2
      // Predicated region
      $region13: #{tpu_custom_call.1} parent=5 // pred_check
        %p242 = pneg %p241
      $region14: #{tpu_custom_call.1} parent=5 // pred_check_branch
        %244 = sbr.rel (%p242) target = $region16
      $region15: #{tpu_custom_call.1} parent=5 // pred_region
        // Predicated region
        $region17: #{tpu_custom_call.1} parent=15 // pred_check
          %p245 = pneg %p74
        $region18: #{tpu_custom_call.1} parent=15 // pred_check_branch
          %247 = sbr.rel (%p245) target = $region20
        $region19: #{tpu_custom_call.1} parent=15 // pred_region
          %s248 = sand.u32 %s64, 1
          %s249 = scalar_lea.sflag [#allocation3], %s248
          %s250 = sand.u32 %s64, 1
          %s251 = smul.addr %s250, 8
          %s252 = scalar_lea.vmem [#allocation2], %s251
          %s253 = sadd.s32 %s35, %s36
          %p254 = scmp.lt.s32.totalorder %s253, 0
          %s255 = scalar_select %p254, %s253, 0
          %257 = vsyncadd %s249, 0
          %s258 = smul.addr %s34, 4
          %s259 = sadd.s32 %s255, %s258
          %s260 = smul.addr %s259, 2
          %s261 = scalar_lea.hbm %s0, %s260
          %s262 = sshll.u32 %s261, 4
          %s263 = int_to_ptr.hbm [resolvable:$true] %s262
          %s264 = sshll.u32 %s252, 4
          %s265 = int_to_ptr.vmem [resolvable:$true] %s264
          %270 = dma.hbm_to_vmem [thread:$0]  %s263, 128, %s265, %s249, 32, 32, 2
        $region20: #{tpu_custom_call.1} parent=15 // pred_fallthru
          _
        // Predicated region
        $region21: #{tpu_custom_call.1} parent=15 // pred_check
          %p271 = pneg %p108
        $region22: #{tpu_custom_call.1} parent=15 // pred_check_branch
          %273 = sbr.rel (%p271) target = $region24
        $region23: #{tpu_custom_call.1} parent=15 // pred_region
          %s274 = sand.u32 %s98, 1
          %s275 = scalar_lea.sflag [#allocation6], %s274
          %s276 = sand.u32 %s98, 1
          %s277 = smul.addr %s276, 8
          %s278 = scalar_lea.vmem [#allocation5], %s277
          %s279 = sadd.s32 %s35, %s36
          %p280 = scmp.lt.s32.totalorder %s279, 0
          %s281 = scalar_select %p280, %s279, 0
          %283 = vsyncadd %s275, 0
          %s284 = smul.addr %s34, 4
          %s285 = sadd.s32 %s281, %s284
          %s286 = smul.addr %s285, 2
          %s287 = scalar_lea.hbm %s1, %s286
          %s288 = sshll.u32 %s287, 4
          %s289 = int_to_ptr.hbm [resolvable:$true] %s288
          %s290 = sshll.u32 %s278, 4
          %s291 = int_to_ptr.vmem [resolvable:$true] %s290
          %296 = dma.hbm_to_vmem [thread:$0]  %s289, 128, %s291, %s275, 32, 32, 2
        $region24: #{tpu_custom_call.1} parent=15 // pred_fallthru
          _
      $region16: #{tpu_custom_call.1} parent=5 // pred_fallthru
        _
      %p297 = scmp.le.s32.totalorder 1, %s27
      %p298 = scmp.lt.s32.totalorder %s27, 3
      %p299 = pnand %p297, %p298
      %p300 = pneg %p299
      // Predicated region
      $region25: #{tpu_custom_call.1} parent=5 // pred_check
        _
      $region26: #{tpu_custom_call.1} parent=5 // pred_check_branch
        %302 = sbr.rel (%p299) target = $region28
      $region27: #{tpu_custom_call.1} parent=5 // pred_region
        %s303 = ssub.s32 %s27, 1
        %s304 = sand.u32 %s67, 1
        %s305 = scalar_lea.sflag [#allocation3], %s304
        %s306 = sand.u32 %s67, 1
        %s307 = smul.addr %s306, 8
        %s308 = scalar_lea.vmem [#allocation2], %s307
        // Predicated region
        $region29: #{tpu_custom_call.1} parent=27 // pred_check
          %p309 = pneg %p80
        $region30: #{tpu_custom_call.1} parent=27 // pred_check_branch
          %311 = sbr.rel (%p309) target = $region32
        $region31: #{tpu_custom_call.1} parent=27 // pred_region
          %313 = dma.done %s305, 128
        $region32: #{tpu_custom_call.1} parent=27 // pred_fallthru
          _
        %s314 = sand.u32 %s101, 1
        %s315 = scalar_lea.sflag [#allocation6], %s314
        %s316 = sand.u32 %s101, 1
        %s317 = smul.addr %s316, 8
        %s318 = scalar_lea.vmem [#allocation5], %s317
        // Predicated region
        $region33: #{tpu_custom_call.1} parent=27 // pred_check
          %p319 = pneg %p114
        $region34: #{tpu_custom_call.1} parent=27 // pred_check_branch
          %321 = sbr.rel (%p319) target = $region36
        $region35: #{tpu_custom_call.1} parent=27 // pred_region
          %323 = dma.done %s315, 128
        $region36: #{tpu_custom_call.1} parent=27 // pred_fallthru
          _
        %s324 = sand.u32 %s67, 1
        %s325 = scalar_lea.sflag [#allocation3], %s324
        %s326 = sand.u32 %s67, 1
        %s327 = smul.addr %s326, 8
        %s328 = scalar_lea.vmem [#allocation2], %s327
        %p329 = pneg %p80
        %p330 = pneg %p77
        %s331 = sand.u32 %s101, 1
        %s332 = scalar_lea.sflag [#allocation6], %s331
        %s333 = sand.u32 %s101, 1
        %s334 = smul.addr %s333, 8
        %s335 = scalar_lea.vmem [#allocation5], %s334
        %p336 = pneg %p114
        %p337 = pneg %p111
        %p338 = pneg %p142
        %p339 = pneg %p139
        %s340 = sand.u32 %s129, 1
        %s341 = scalar_lea.sflag [#allocation4], %s340
        %s342 = sand.u32 %s129, 1
        %s343 = smul.addr %s342, 4
        %s344 = scalar_lea.vmem [#allocation7], %s343
        %p345 = pneg %p170
        %p346 = pneg %p167
        %s347 = sand.u32 %s32, 1
        %s348 = scalar_lea.sflag [#allocation9], %s347
        %s349 = sand.u32 %s157, 1
        %s350 = smul.addr %s349, 4
        %s351 = scalar_lea.vmem [#allocation8], %s350
        %p352 = pneg %p198
        %p353 = pneg %p195
        %s354 = sand.u32 %s32, 1
        %s355 = scalar_lea.sflag [#allocation9], %s354
        %s356 = sand.u32 %s185, 1
        %s357 = smul.addr %s356, 4
        %s358 = scalar_lea.vmem [#allocation10], %s357
        %p359 = pneg %p226
        %p360 = pneg %p223
        %s361 = sand.u32 %s213, 1
        %s362 = scalar_lea.sflag [#allocation12], %s361
        %s363 = sand.u32 %s213, 1
        %s364 = smul.addr %s363, 4
        %s365 = scalar_lea.vmem [#allocation11], %s364
        %s366 = sadd.s32 %s38, %s39
        %p367 = scmp.lt.s32.totalorder %s366, 0
        %s368 = scalar_select %p367, %s366, 0
        %s369 = sadd.s32 %s38, %s39
        %p370 = scmp.lt.s32.totalorder %s369, 0
        %s371 = scalar_select %p370, %s369, 0
        %p372 = scmp.eq.s32.totalorder %s39, 0
        // Predicated region
        $region37: #{tpu_custom_call.1} parent=27 // pred_check
          %p373 = pneg %p372
        $region38: #{tpu_custom_call.1} parent=27 // pred_check_branch
          %375 = sbr.rel (%p373) target = $region40
        $region39: #{tpu_custom_call.1} parent=27 // pred_region
          %376 = vst [vmem:[%s344] sm:$0xf] 0.0
          %377 = vst [vmem:[%s351] sm:$0xf] 0.0
          %378 = vst [vmem:[%s358] sm:$0xf] 0.0
          %379 = vst [vmem:[%s365] sm:$0xf] 0.0
        $region40: #{tpu_custom_call.1} parent=27 // pred_fallthru
          _
        %v380 = vld [vmem:[%s308] sm:$0x3]
        %v381 = vld [vmem:[%s308 + $0x2] sm:$0x3]
        %v382 = vld [vmem:[%s308 + $0x4] sm:$0x3]
        %v383 = vld [vmem:[%s308 + $0x6] sm:$0x3]
        %v384 = vld [vmem:[%s318] sm:$0x3]
        %v385 = vld [vmem:[%s318 + $0x2] sm:$0x3]
        %v386 = vld [vmem:[%s318 + $0x4] sm:$0x3]
        %v387 = vld [vmem:[%s318 + $0x6] sm:$0x3]
        %v388 = vlog2.pop %v380
        %v389 = vmul.f32 %v388, 0.6931472
        %v390 = vlog2.pop %v381
        %v391 = vmul.f32 %v390, 0.6931472
        %v392 = vlog2.pop %v382
        %v393 = vmul.f32 %v392, 0.6931472
        %v394 = vlog2.pop %v383
        %v395 = vmul.f32 %v394, 0.6931472
        %v396 = vmax.f32 %v389, -100.0
        %v397 = vmax.f32 %v391, -100.0
        %v398 = vmax.f32 %v393, -100.0
        %v399 = vmax.f32 %v395, -100.0
        %v400 = vsub.f32 1.0, %v380
        %v401 = vsub.f32 1.0, %v381
        %v402 = vsub.f32 1.0, %v382
        %v403 = vsub.f32 1.0, %v383
        %v404 = vlog2.pop %v400
        %v405 = vmul.f32 %v404, 0.6931472
        %v406 = vlog2.pop %v401
        %v407 = vmul.f32 %v406, 0.6931472
        %v408 = vlog2.pop %v402
        %v409 = vmul.f32 %v408, 0.6931472
        %v410 = vlog2.pop %v403
        %v411 = vmul.f32 %v410, 0.6931472
        %v412 = vmax.f32 %v405, -100.0
        %v413 = vmax.f32 %v407, -100.0
        %v414 = vmax.f32 %v409, -100.0
        %v415 = vmax.f32 %v411, -100.0
        %v416 = vsub.f32 %v396, %v412
        %v417 = vsub.f32 %v397, %v413
        %v418 = vsub.f32 %v398, %v414
        %v419 = vsub.f32 %v399, %v415
        %v420 = vmul.f32 %v384, %v416
        %v421 = vmul.f32 %v385, %v417
        %v422 = vmul.f32 %v386, %v418
        %v423 = vmul.f32 %v387, %v419
        %v424 = vadd.f32 %v412, %v420
        %v425 = vadd.f32 %v413, %v421
        %v426 = vadd.f32 %v414, %v422
        %v427 = vadd.f32 %v415, %v423
        %v428 = vsub.f32 0.0, %v424
        %v429 = vsub.f32 0.0, %v425
        %v430 = vsub.f32 0.0, %v426
        %v431 = vsub.f32 0.0, %v427
        %v432 = vld [vmem:[%s344] sm:$0xf]
        %v433 = vmul.f32 %v380, %v384
        %v434 = vmul.f32 %v381, %v385
        %v435 = vmul.f32 %v382, %v386
        %v436 = vmul.f32 %v383, %v387
        %vm437 = vcmask 1041408
        %v438 = vsel %vm437, %v433, 0.0
        %v439 = vrot.slane %v438, 4
        %v440 = vadd.f32 %v438, %v439
        %v441 = vrot.slane %v440, 2
        %v442 = vadd.f32 %v440, %v441
        %v443 = vrot.slane %v442, 1
        %v444 = vadd.f32 %v442, %v443
        %v445 = vsel %vm437, %v434, 0.0
        %v446 = vrot.slane %v445, 4
        %v447 = vadd.f32 %v445, %v446
        %v448 = vrot.slane %v447, 2
        %v449 = vadd.f32 %v447, %v448
        %v450 = vrot.slane %v449, 1
        %v451 = vadd.f32 %v449, %v450
        %v452 = vsel %vm437, %v435, 0.0
        %v453 = vrot.slane %v452, 4
        %v454 = vadd.f32 %v452, %v453
        %v455 = vrot.slane %v454, 2
        %v456 = vadd.f32 %v454, %v455
        %v457 = vrot.slane %v456, 1
        %v458 = vadd.f32 %v456, %v457
        %v459 = vsel %vm437, %v436, 0.0
        %v460 = vrot.slane %v459, 4
        %v461 = vadd.f32 %v459, %v460
        %v462 = vrot.slane %v461, 2
        %v463 = vadd.f32 %v461, %v462
        %v464 = vrot.slane %v463, 1
        %v465 = vadd.f32 %v463, %v464
        %vm470 = vcmask 1041409
        %v471 = vsel %vm470, %v451, %v444
        %vm472 = vcmask 1042434
        %v473 = vsel %vm472, %v458, %v471
        %vm474 = vcmask 1043459
        %v475 = vsel %vm474, %v465, %v473
        %v477 = vadd.f32 %v432, %v475
        %478 = vst [vmem:[%s344] sm:$0xf] %v477
        %v479 = vld [vmem:[%s351] sm:$0xf]
        %v480 = vsel %vm437, %v380, 0.0
        %v481 = vrot.slane %v480, 4
        %v482 = vadd.f32 %v480, %v481
        %v483 = vrot.slane %v482, 2
        %v484 = vadd.f32 %v482, %v483
        %v485 = vrot.slane %v484, 1
        %v486 = vadd.f32 %v484, %v485
        %v487 = vsel %vm437, %v381, 0.0
        %v488 = vrot.slane %v487, 4
        %v489 = vadd.f32 %v487, %v488
        %v490 = vrot.slane %v489, 2
        %v491 = vadd.f32 %v489, %v490
        %v492 = vrot.slane %v491, 1
        %v493 = vadd.f32 %v491, %v492
        %v494 = vsel %vm437, %v382, 0.0
        %v495 = vrot.slane %v494, 4
        %v496 = vadd.f32 %v494, %v495
        %v497 = vrot.slane %v496, 2
        %v498 = vadd.f32 %v496, %v497
        %v499 = vrot.slane %v498, 1
        %v500 = vadd.f32 %v498, %v499
        %v501 = vsel %vm437, %v383, 0.0
        %v502 = vrot.slane %v501, 4
        %v503 = vadd.f32 %v501, %v502
        %v504 = vrot.slane %v503, 2
        %v505 = vadd.f32 %v503, %v504
        %v506 = vrot.slane %v505, 1
        %v507 = vadd.f32 %v505, %v506
        %v512 = vsel %vm470, %v493, %v486
        %v513 = vsel %vm472, %v500, %v512
        %v514 = vsel %vm474, %v507, %v513
        %v516 = vadd.f32 %v479, %v514
        %517 = vst [vmem:[%s351] sm:$0xf] %v516
        %v518 = vld [vmem:[%s358] sm:$0xf]
        %v519 = vsel %vm437, %v384, 0.0
        %v520 = vrot.slane %v519, 4
        %v521 = vadd.f32 %v519, %v520
        %v522 = vrot.slane %v521, 2
        %v523 = vadd.f32 %v521, %v522
        %v524 = vrot.slane %v523, 1
        %v525 = vadd.f32 %v523, %v524
        %v526 = vsel %vm437, %v385, 0.0
        %v527 = vrot.slane %v526, 4
        %v528 = vadd.f32 %v526, %v527
        %v529 = vrot.slane %v528, 2
        %v530 = vadd.f32 %v528, %v529
        %v531 = vrot.slane %v530, 1
        %v532 = vadd.f32 %v530, %v531
        %v533 = vsel %vm437, %v386, 0.0
        %v534 = vrot.slane %v533, 4
        %v535 = vadd.f32 %v533, %v534
        %v536 = vrot.slane %v535, 2
        %v537 = vadd.f32 %v535, %v536
        %v538 = vrot.slane %v537, 1
        %v539 = vadd.f32 %v537, %v538
        %v540 = vsel %vm437, %v387, 0.0
        %v541 = vrot.slane %v540, 4
        %v542 = vadd.f32 %v540, %v541
        %v543 = vrot.slane %v542, 2
        %v544 = vadd.f32 %v542, %v543
        %v545 = vrot.slane %v544, 1
        %v546 = vadd.f32 %v544, %v545
        %v551 = vsel %vm470, %v532, %v525
        %v552 = vsel %vm472, %v539, %v551
        %v553 = vsel %vm474, %v546, %v552
        %v555 = vadd.f32 %v518, %v553
        %556 = vst [vmem:[%s358] sm:$0xf] %v555
        %v557 = vld [vmem:[%s365] sm:$0xf]
        %v558 = vsel %vm437, %v428, 0.0
        %v559 = vrot.slane %v558, 4
        %v560 = vadd.f32 %v558, %v559
        %v561 = vrot.slane %v560, 2
        %v562 = vadd.f32 %v560, %v561
        %v563 = vrot.slane %v562, 1
        %v564 = vadd.f32 %v562, %v563
        %v565 = vsel %vm437, %v429, 0.0
        %v566 = vrot.slane %v565, 4
        %v567 = vadd.f32 %v565, %v566
        %v568 = vrot.slane %v567, 2
        %v569 = vadd.f32 %v567, %v568
        %v570 = vrot.slane %v569, 1
        %v571 = vadd.f32 %v569, %v570
        %v572 = vsel %vm437, %v430, 0.0
        %v573 = vrot.slane %v572, 4
        %v574 = vadd.f32 %v572, %v573
        %v575 = vrot.slane %v574, 2
        %v576 = vadd.f32 %v574, %v575
        %v577 = vrot.slane %v576, 1
        %v578 = vadd.f32 %v576, %v577
        %v579 = vsel %vm437, %v431, 0.0
        %v580 = vrot.slane %v579, 4
        %v581 = vadd.f32 %v579, %v580
        %v582 = vrot.slane %v581, 2
        %v583 = vadd.f32 %v581, %v582
        %v584 = vrot.slane %v583, 1
        %v585 = vadd.f32 %v583, %v584
        %v590 = vsel %vm470, %v571, %v564
        %v591 = vsel %vm472, %v578, %v590
        %v592 = vsel %vm474, %v585, %v591
        %v594 = vadd.f32 %v557, %v592
        %595 = vst [vmem:[%s365] sm:$0xf] %v594
        %s596 = sand.u32 %s129, 1
        %s597 = scalar_lea.sflag [#allocation4], %s596
        %s598 = sand.u32 %s129, 1
        %s599 = smul.addr %s598, 4
        %s600 = scalar_lea.vmem [#allocation7], %s599
        %s601 = sand.u32 %s32, 1
        %s602 = scalar_lea.sflag [#allocation9], %s601
        %s603 = sand.u32 %s157, 1
        %s604 = smul.addr %s603, 4
        %s605 = scalar_lea.vmem [#allocation8], %s604
        %s606 = sand.u32 %s32, 1
        %s607 = scalar_lea.sflag [#allocation9], %s606
        %s608 = sand.u32 %s185, 1
        %s609 = smul.addr %s608, 4
        %s610 = scalar_lea.vmem [#allocation10], %s609
        %s611 = sand.u32 %s213, 1
        %s612 = scalar_lea.sflag [#allocation12], %s611
        %s613 = sand.u32 %s213, 1
        %s614 = smul.addr %s613, 4
        %s615 = scalar_lea.vmem [#allocation11], %s614
        // Predicated region
        $region41: #{tpu_custom_call.1} parent=27 // pred_check
          %p616 = pneg %p139
        $region42: #{tpu_custom_call.1} parent=27 // pred_check_branch
          %618 = sbr.rel (%p616) target = $region44
        $region43: #{tpu_custom_call.1} parent=27 // pred_region
          %620 = vsyncadd %s597, 0
          %s621 = sadd.s32 %s38, %s37
          %s622 = smul.addr %s621, 4
          %s623 = scalar_lea.hbm %s2, %s622
          %s625 = sshll.u32 %s600, 4
          %s626 = int_to_ptr.vmem [resolvable:$true] %s625
          %s627 = sshll.u32 %s623, 4
          %s628 = int_to_ptr.hbm [resolvable:$true] %s627
          %630 = dma.vmem_to_hbm [thread:$0]  %s626, 64, %s628, %s597
        $region44: #{tpu_custom_call.1} parent=27 // pred_fallthru
          _
        // Predicated region
        $region45: #{tpu_custom_call.1} parent=27 // pred_check
          %p631 = pneg %p167
        $region46: #{tpu_custom_call.1} parent=27 // pred_check_branch
          %633 = sbr.rel (%p631) target = $region48
        $region47: #{tpu_custom_call.1} parent=27 // pred_region
          %635 = vsyncadd %s602, 0
          %s636 = sadd.s32 %s38, %s37
          %s637 = smul.addr %s636, 4
          %s638 = scalar_lea.hbm %s3, %s637
          %s640 = sshll.u32 %s605, 4
          %s641 = int_to_ptr.vmem [resolvable:$true] %s640
          %s642 = sshll.u32 %s638, 4
          %s643 = int_to_ptr.hbm [resolvable:$true] %s642
          %645 = dma.vmem_to_hbm [thread:$0]  %s641, 64, %s643, %s602
        $region48: #{tpu_custom_call.1} parent=27 // pred_fallthru
          _
        // Predicated region
        $region49: #{tpu_custom_call.1} parent=27 // pred_check
          %p646 = pneg %p195
        $region50: #{tpu_custom_call.1} parent=27 // pred_check_branch
          %648 = sbr.rel (%p646) target = $region52
        $region51: #{tpu_custom_call.1} parent=27 // pred_region
          %650 = vsyncadd %s607, 0
          %s651 = sadd.s32 %s38, %s37
          %s652 = smul.addr %s651, 4
          %s653 = scalar_lea.hbm %s4, %s652
          %s655 = sshll.u32 %s610, 4
          %s656 = int_to_ptr.vmem [resolvable:$true] %s655
          %s657 = sshll.u32 %s653, 4
          %s658 = int_to_ptr.hbm [resolvable:$true] %s657
          %660 = dma.vmem_to_hbm [thread:$0]  %s656, 64, %s658, %s607
        $region52: #{tpu_custom_call.1} parent=27 // pred_fallthru
          _
        // Predicated region
        $region53: #{tpu_custom_call.1} parent=27 // pred_check
          %p661 = pneg %p223
        $region54: #{tpu_custom_call.1} parent=27 // pred_check_branch
          %663 = sbr.rel (%p661) target = $region56
        $region55: #{tpu_custom_call.1} parent=27 // pred_region
          %665 = vsyncadd %s612, 0
          %s666 = sadd.s32 %s38, %s37
          %s667 = smul.addr %s666, 4
          %s668 = scalar_lea.hbm %s5, %s667
          %s670 = sshll.u32 %s615, 4
          %s671 = int_to_ptr.vmem [resolvable:$true] %s670
          %s672 = sshll.u32 %s668, 4
          %s673 = int_to_ptr.hbm [resolvable:$true] %s672
          %675 = dma.vmem_to_hbm [thread:$0]  %s671, 64, %s673, %s612
        $region56: #{tpu_custom_call.1} parent=27 // pred_fallthru
          _
      $region28: #{tpu_custom_call.1} parent=5 // pred_fallthru
        _
      %p676 = scmp.le.s32.totalorder 2, %s27
      // Predicated region
      $region57: #{tpu_custom_call.1} parent=5 // pred_check
        %p677 = pneg %p676
      $region58: #{tpu_custom_call.1} parent=5 // pred_check_branch
        %679 = sbr.rel (%p677) target = $region60
      $region59: #{tpu_custom_call.1} parent=5 // pred_region
        %s680 = ssub.s32 %s27, 2
        // Predicated region
        $region61: #{tpu_custom_call.1} parent=59 // pred_check
          %p681 = pneg %p145
        $region62: #{tpu_custom_call.1} parent=59 // pred_check_branch
          %683 = sbr.rel (%p681) target = $region64
        $region63: #{tpu_custom_call.1} parent=59 // pred_region
          %s684 = sand.u32 %s130, 1
          %s685 = scalar_lea.sflag [#allocation4], %s684
          %s686 = sand.u32 %s130, 1
          %s687 = smul.addr %s686, 4
          %s688 = scalar_lea.vmem [#allocation7], %s687
          %690 = dma.done %s685, 64
        $region64: #{tpu_custom_call.1} parent=59 // pred_fallthru
          _
        // Predicated region
        $region65: #{tpu_custom_call.1} parent=59 // pred_check
          %p691 = pneg %p173
        $region66: #{tpu_custom_call.1} parent=59 // pred_check_branch
          %693 = sbr.rel (%p691) target = $region68
        $region67: #{tpu_custom_call.1} parent=59 // pred_region
          %s694 = sand.u32 %s33, 1
          %s695 = scalar_lea.sflag [#allocation9], %s694
          %s696 = sand.u32 %s158, 1
          %s697 = smul.addr %s696, 4
          %s698 = scalar_lea.vmem [#allocation8], %s697
          %700 = dma.done %s695, 64
        $region68: #{tpu_custom_call.1} parent=59 // pred_fallthru
          _
        // Predicated region
        $region69: #{tpu_custom_call.1} parent=59 // pred_check
          %p701 = pneg %p201
        $region70: #{tpu_custom_call.1} parent=59 // pred_check_branch
          %703 = sbr.rel (%p701) target = $region72
        $region71: #{tpu_custom_call.1} parent=59 // pred_region
          %s704 = sand.u32 %s33, 1
          %s705 = scalar_lea.sflag [#allocation9], %s704
          %s706 = sand.u32 %s186, 1
          %s707 = smul.addr %s706, 4
          %s708 = scalar_lea.vmem [#allocation10], %s707
          %710 = dma.done %s705, 64
        $region72: #{tpu_custom_call.1} parent=59 // pred_fallthru
          _
        // Predicated region
        $region73: #{tpu_custom_call.1} parent=59 // pred_check
          %p711 = pneg %p229
        $region74: #{tpu_custom_call.1} parent=59 // pred_check_branch
          %713 = sbr.rel (%p711) target = $region76
        $region75: #{tpu_custom_call.1} parent=59 // pred_region
          %s714 = sand.u32 %s214, 1
          %s715 = scalar_lea.sflag [#allocation12], %s714
          %s716 = sand.u32 %s214, 1
          %s717 = smul.addr %s716, 4
          %s718 = scalar_lea.vmem [#allocation11], %s717
          %720 = dma.done %s715, 64
        $region76: #{tpu_custom_call.1} parent=59 // pred_fallthru
          _
      $region60: #{tpu_custom_call.1} parent=5 // pred_fallthru
        _
    $region6: #{tpu_custom_call.1} parent=1 // loop_footer
      %s31 = sadd.s32 1, %s27
    $region7: #{tpu_custom_call.1} parent=1 // loop_footer_branch
      %26 = sbr.rel target = $region3
    $region8: #{tpu_custom_call.1} parent=1 // loop_exit
      _
    %721 = vsyncpa [#allocation3], 1
    %s722 = scalar_lea.sflag [#allocation3], 1
    %723 = vsyncpa %s722, 1
    %724 = vsyncpa [#allocation6], 1
    %s725 = scalar_lea.sflag [#allocation6], 1
    %726 = vsyncpa %s725, 1
    %727 = vsyncpa [#allocation4], 1
    %s728 = scalar_lea.sflag [#allocation4], 1
    %729 = vsyncpa %s728, 1
    %730 = vsyncpa [#allocation9], 1
    %s731 = scalar_lea.sflag [#allocation9], 1
    %732 = vsyncpa %s731, 1
    %733 = vsyncpa [#allocation12], 1
    %s734 = scalar_lea.sflag [#allocation12], 1
    %735 = vsyncpa %s734, 1

</llo_original>
